<compile_context>
chip_gen: v6e
topology: v6e:2x2x1
jax: 0.10.0
libtpu: 0.0.40
codegen_flags: <defaults>
</compile_context>

<pallas_src>
import jax
import jax.numpy as jnp
from jax import lax
from jax.experimental import pallas as pl
from jax.experimental.pallas import tpu as pltpu

NUM_CLASSES = 30
PADDED_CLASSES = 128          # lane-dense output width (avoids masked vst on 30 lanes)
_SQRT_HALF = 0.7071067811865476
_SQRT_2_OVER_PI = 0.7978845608028654


# ----------------------------- GELU variants ---------------------------------

def _gelu_exact(x):
    # PyTorch nn.GELU() default = exact erf formulation, evaluated in f32.
    return 0.5 * x * (1.0 + lax.erf(x * _SQRT_HALF))


def _gelu_tanh(x):
    # tanh approximation: tanh goes to the EUP (separate bundle slot), unlike
    # the erf polynomial which burns VPU/VALU slots at these tiny matmul shapes.
    x3 = x * x * x
    return 0.5 * x * (1.0 + jnp.tanh(_SQRT_2_OVER_PI * (x + 0.044715 * x3)))


# ------------------------------- kernel ---------------------------------------

def _make_kernel(gelu_fn):
    def kernel(x_ref, w1_ref, b1_ref, w2_ref, b2_ref, w3_ref, b3_ref, o_ref):
        # Dropout(p=0.2) layers are identity at inference time (eval semantics).
        # TODO(synk): training-mode stochastic dropout would use
        # pltpu.prng_seed / pltpu.prng_random_bits to build keep-masks in-kernel.
        x = x_ref[...].astype(jnp.bfloat16)                      # cast in VMEM

        h1 = jnp.dot(x, w1_ref[...],
                     preferred_element_type=jnp.float32) + b1_ref[...]
        h1 = gelu_fn(h1)                                         # f32 epilogue

        h2 = jnp.dot(h1.astype(jnp.bfloat16), w2_ref[...],
                     preferred_element_type=jnp.float32) + b2_ref[...]
        h2 = gelu_fn(h2)

        y = jnp.dot(h2.astype(jnp.bfloat16), w3_ref[...],
                    preferred_element_type=jnp.float32) + b3_ref[...]
        o_ref[...] = y.astype(o_ref.dtype)
    return kernel


# ------------------------------ helpers ---------------------------------------

def _round_up(x, m):
    return (x + m - 1) // m * m


def _cdiv(a, b):
    return -(-a // b)


def _weight_vmem_bytes(d_in, d_mid, d_out, out_pad):
    wbytes = 2 * (d_in * d_mid + d_mid * d_out + d_out * out_pad)   # bf16 weights
    bbytes = 4 * (d_mid + d_out + out_pad)                          # f32 biases
    return wbytes + bbytes


def _block_vmem_bytes(tb, d_in, d_mid, d_out, out_pad, x_itemsize):
    xbytes = x_itemsize * tb * d_in * 2      # double-buffered input blocks
    obytes = 2 * tb * out_pad * 2            # double-buffered bf16 output blocks
    act = 4 * tb * (d_mid + d_out) * 2       # f32 intermediates h1/h2 (+ headroom)
    return xbytes + obytes + act


def prepare_params(params):
    """Cast weights to bf16, keep biases f32, pad the last layer to 128 lanes."""
    pad = PADDED_CLASSES - params["w3"].shape[1]
    return {
        "w1": params["w1"].astype(jnp.bfloat16),
        "b1": params["b1"].astype(jnp.float32),
        "w2": params["w2"].astype(jnp.bfloat16),
        "b2": params["b2"].astype(jnp.float32),
        "w3": jnp.pad(params["w3"], ((0, 0), (0, pad))).astype(jnp.bfloat16),
        "b3": jnp.pad(params["b3"], ((0, 0), (0, pad))).astype(jnp.float32),
    }


# ------------------------------ forward ---------------------------------------

def base_classifier_forward(x, prepared, *, num_classes=NUM_CLASSES,
                            block_rows=1024, out_dtype=jnp.bfloat16,
                            approximate_gelu=True,
                            vmem_budget_bytes=56 * 2**20):
    """x: (B, hidden*3), native dtype (f32 ok). Returns (B, num_classes) logits."""
    B, d_in = x.shape
    w1, b1 = prepared["w1"], prepared["b1"]
    w2, b2 = prepared["w2"], prepared["b2"]
    w3, b3 = prepared["w3"], prepared["b3"]
    d_mid, d_out, out_pad = w1.shape[1], w2.shape[1], w3.shape[1]

    # --- batch tile: multiple of 16, and >= 2 grid steps when the batch allows
    #     it so the "parallel" axis shards across both TensorCores on v7x.
    block_rows = max(16, _round_up(int(block_rows), 16))
    TB = max(16, min(block_rows, _round_up(_cdiv(B, 2), 16)))
    TB = max(8, min(TB, _round_up(B, 8)))    # don't exceed one block's worth of rows

    # --- VMEM budget guard (v7x has only 64 MiB physical VMEM; leave headroom).
    x_itemsize = jnp.dtype(x.dtype).itemsize
    w_bytes = _weight_vmem_bytes(d_in, d_mid, d_out, out_pad)
    if w_bytes + _block_vmem_bytes(16, d_in, d_mid, d_out, out_pad,
                                   x_itemsize) > vmem_budget_bytes:
        # TODO(synk): for very large hidden sizes, tile w1 along its 2H output
        # dim (extra "arbitrary" grid axis + f32 accumulator scratch) instead of
        # keeping all weights VMEM-resident.
        raise ValueError("hidden_size too large for VMEM-resident weights")
    while (w_bytes + _block_vmem_bytes(TB, d_in, d_mid, d_out, out_pad, x_itemsize)
           > vmem_budget_bytes) and TB > 16:
        TB = max(16, _round_up(TB // 2, 16))
    est = w_bytes + _block_vmem_bytes(TB, d_in, d_mid, d_out, out_pad, x_itemsize)
    vmem_limit = int(min(vmem_budget_bytes, max(32 * 2**20, est * 3 // 2)))

    grid = (_cdiv(B, TB),)
    kernel = _make_kernel(_gelu_tanh if approximate_gelu else _gelu_exact)

    cost = pl.CostEstimate(
        flops=int(2 * B * (d_in * d_mid + d_mid * d_out + d_out * out_pad)),
        transcendentals=int(B * (d_mid + d_out)),
        bytes_accessed=int(x_itemsize * B * d_in + w_bytes
                           + jnp.dtype(out_dtype).itemsize * B * out_pad),
    )

    def run(single_buffer_weights):
        res_kw = {}
        if single_buffer_weights and hasattr(pl, "Buffered"):
            # Constant-index (resident) blocks don't need double-buffering.
            res_kw = dict(pipeline_mode=pl.Buffered(1))

        def resident(a):
            # Full-array block, constant index_map -> stays VMEM-resident.
            return pl.BlockSpec(a.shape, lambda i: (0,) * a.ndim, **res_kw)

        return pl.pallas_call(
            kernel,
            out_shape=jax.ShapeDtypeStruct((B, out_pad), out_dtype),
            grid=grid,
            in_specs=[
                pl.BlockSpec((TB, d_in), lambda i: (i, 0)),
                resident(w1), resident(b1),
                resident(w2), resident(b2),
                resident(w3), resident(b3),
            ],
            out_specs=pl.BlockSpec((TB, out_pad), lambda i: (i, 0)),
            compiler_params=pltpu.CompilerParams(
                dimension_semantics=("parallel",),
                vmem_limit_bytes=vmem_limit),
            cost_estimate=cost,
        )(x, w1, b1, w2, b2, w3, b3)

    try:
        out = run(single_buffer_weights=True)
    except Exception:
        # pl.Buffered(1) not supported on this jax version -> default pipelining.
        out = run(single_buffer_weights=False)

    return out[:, :num_classes]


# ------------------------- params & references --------------------------------

def init_params(key, hidden_size, concat_num=3, num_classes=NUM_CLASSES):
    """Deterministic synthetic parameters.

    PyTorch nn.Linear stores weight as (out, in); we store the transpose
    (in, out) so the kernel does y = x @ W + b directly.
    """
    k1, k2, k3, k4, k5, k6 = jax.random.split(key, 6)
    d_in = hidden_size * concat_num
    d_mid = hidden_size * 2
    d_out = hidden_size
    scale = 0.02
    return {
        "w1": scale * jax.random.normal(k1, (d_in, d_mid), jnp.float32),
        "b1": scale * jax.random.normal(k2, (1, d_mid), jnp.float32),
        "w2": scale * jax.random.normal(k3, (d_mid, d_out), jnp.float32),
        "b2": scale * jax.random.normal(k4, (1, d_out), jnp.float32),
        "w3": scale * jax.random.normal(k5, (d_out, num_classes), jnp.float32),
        "b3": scale * jax.random.normal(k6, (1, num_classes), jnp.float32),
    }


def reference_forward_f32(x, params):
    """Pure-f32 exact-GELU reference matching the PyTorch module."""
    h1 = _gelu_exact(x @ params["w1"] + params["b1"])
    h2 = _gelu_exact(h1 @ params["w2"] + params["b2"])
    return h2 @ params["w3"] + params["b3"]


def reference_forward_matched(x, prepared, num_classes=NUM_CLASSES,
                              approximate_gelu=True, out_dtype=jnp.bfloat16):
    """Reference using the same bf16-operand / f32-accumulate recipe as the kernel."""
    g = _gelu_tanh if approximate_gelu else _gelu_exact
    xb = x.astype(jnp.bfloat16)
    h1 = g(jnp.dot(xb, prepared["w1"],
                   preferred_element_type=jnp.float32) + prepared["b1"])
    h2 = g(jnp.dot(h1.astype(jnp.bfloat16), prepared["w2"],
                   preferred_element_type=jnp.float32) + prepared["b2"])
    out = jnp.dot(h2.astype(jnp.bfloat16), prepared["w3"],
                  preferred_element_type=jnp.float32) + prepared["b3"]
    return out.astype(out_dtype)[:, :num_classes]


# ----------------------------------- demo -------------------------------------

if __name__ == "__main__":
    hidden_size = 32
    concat_num = 3

    key = jax.random.PRNGKey(0)
    kx, kp, kx2 = jax.random.split(key, 3)
    params = init_params(kp, hidden_size, concat_num)
    prepared = prepare_params(params)

    # --- small batch (single grid step, exact-fit 8-row tile) ---
    batch = 8
    x = jax.random.normal(kx, (batch, hidden_size * concat_num), jnp.float32)
    out = jax.block_until_ready(base_classifier_forward(x, prepared))
    assert out.shape == (batch, NUM_CLASSES), out.shape
    ref_m = reference_forward_matched(x, prepared)
    assert jnp.allclose(out.astype(jnp.float32), ref_m.astype(jnp.float32),
                        atol=1e-2, rtol=1e-2), "mismatch vs matched-precision reference"
    assert jnp.allclose(out.astype(jnp.float32), reference_forward_f32(x, params),
                        atol=5e-2, rtol=5e-2), "mismatch vs f32 reference"

    # --- batch not a multiple of the tile (multi-step grid, ragged last block) ---
    batch2 = 300
    x2 = jax.random.normal(kx2, (batch2, hidden_size * concat_num), jnp.float32)
    out2 = jax.block_until_ready(
        base_classifier_forward(x2, prepared, block_rows=128))
    assert out2.shape == (batch2, NUM_CLASSES), out2.shape
    ref2 = reference_forward_matched(x2, prepared)
    assert jnp.allclose(out2.astype(jnp.float32), ref2.astype(jnp.float32),
                        atol=1e-2, rtol=1e-2), "mismatch vs matched reference (ragged)"

    print("KERNEL_OK")
</pallas_src>

<mosaic_0001>
module attributes {stable_mosaic.version = 11 : i64} {
  func.func @kernel(%arg0: i32, %arg1: memref<8x96xf32, #tpu.memory_space<vmem>>, %arg2: memref<96x64xbf16, #tpu.memory_space<vmem>>, %arg3: memref<1x64xf32, #tpu.memory_space<vmem>>, %arg4: memref<64x32xbf16, #tpu.memory_space<vmem>>, %arg5: memref<1x32xf32, #tpu.memory_space<vmem>>, %arg6: memref<32x128xbf16, #tpu.memory_space<vmem>>, %arg7: memref<1x128xf32, #tpu.memory_space<vmem>>, %arg8: memref<8x128xbf16, #tpu.memory_space<vmem>>) attributes {dimension_semantics = [#tpu.dimension_semantics<parallel>], iteration_bounds = array<i64: 1>, scalar_prefetch = 0 : i64, scratch_operands = 0 : i64, tpu.core_type = #tpu.core_type<tc>, window_params = [{transform_indices = @transform_0, window_bounds = array<i64: 8, 96>}, {pipeline_mode = #tpu.pipeline_mode<synchronous>, transform_indices = @transform_1, window_bounds = array<i64: 96, 64>}, {pipeline_mode = #tpu.pipeline_mode<synchronous>, transform_indices = @transform_2, window_bounds = array<i64: 1, 64>}, {pipeline_mode = #tpu.pipeline_mode<synchronous>, transform_indices = @transform_3, window_bounds = array<i64: 64, 32>}, {pipeline_mode = #tpu.pipeline_mode<synchronous>, transform_indices = @transform_4, window_bounds = array<i64: 1, 32>}, {pipeline_mode = #tpu.pipeline_mode<synchronous>, transform_indices = @transform_5, window_bounds = array<i64: 32, 128>}, {pipeline_mode = #tpu.pipeline_mode<synchronous>, transform_indices = @transform_6, window_bounds = array<i64: 1, 128>}, {transform_indices = @transform_7, window_bounds = array<i64: 8, 128>}]} {
    %c0 = arith.constant 0 : index
    %c0_0 = arith.constant 0 : index
    %0 = vector.load %arg1[%c0, %c0_0] : memref<8x96xf32, #tpu.memory_space<vmem>>, vector<8x96xf32>
    %1 = arith.truncf %0 : vector<8x96xf32> to vector<8x96xbf16>
    %c0_1 = arith.constant 0 : index
    %c0_2 = arith.constant 0 : index
    %2 = vector.load %arg2[%c0_1, %c0_2] : memref<96x64xbf16, #tpu.memory_space<vmem>>, vector<96x64xbf16>
    %cst = arith.constant dense<0.000000e+00> : vector<8x64xf32>
    %3 = tpu.matmul %1, %2, %cst {dimension_numbers = #tpu.dot_dimension_numbers<[1], [0], [0], [1], [0, 0, 1, 1], [], []>} : vector<8x96xbf16>, vector<96x64xbf16>, vector<8x64xf32> -> vector<8x64xf32>
    %c0_3 = arith.constant 0 : index
    %c0_4 = arith.constant 0 : index
    %4 = vector.load %arg3[%c0_3, %c0_4] : memref<1x64xf32, #tpu.memory_space<vmem>>, vector<1x64xf32>
    %5 = vector.broadcast %4 : vector<1x64xf32> to vector<8x64xf32>
    %6 = arith.addf %3, %5 : vector<8x64xf32>
    %7 = arith.mulf %6, %6 : vector<8x64xf32>
    %8 = arith.mulf %7, %6 : vector<8x64xf32>
    %cst_5 = arith.constant 5.000000e-01 : f32
    %9 = vector.broadcast %cst_5 : f32 to vector<8x64xf32>
    %10 = arith.mulf %9, %6 : vector<8x64xf32>
    %cst_6 = arith.constant 4.471500e-02 : f32
    %11 = vector.broadcast %cst_6 : f32 to vector<8x64xf32>
    %12 = arith.mulf %11, %8 : vector<8x64xf32>
    %13 = arith.addf %6, %12 : vector<8x64xf32>
    %cst_7 = arith.constant 0.797884583 : f32
    %14 = vector.broadcast %cst_7 : f32 to vector<8x64xf32>
    %15 = arith.mulf %14, %13 : vector<8x64xf32>
    %16 = math.tanh %15 : vector<8x64xf32>
    %cst_8 = arith.constant 1.000000e+00 : f32
    %17 = vector.broadcast %cst_8 : f32 to vector<8x64xf32>
    %18 = arith.addf %17, %16 : vector<8x64xf32>
    %19 = arith.mulf %10, %18 : vector<8x64xf32>
    %20 = arith.truncf %19 : vector<8x64xf32> to vector<8x64xbf16>
    %c0_9 = arith.constant 0 : index
    %c0_10 = arith.constant 0 : index
    %21 = vector.load %arg4[%c0_9, %c0_10] : memref<64x32xbf16, #tpu.memory_space<vmem>>, vector<64x32xbf16>
    %cst_11 = arith.constant dense<0.000000e+00> : vector<8x32xf32>
    %22 = tpu.matmul %20, %21, %cst_11 {dimension_numbers = #tpu.dot_dimension_numbers<[1], [0], [0], [1], [0, 0, 1, 1], [], []>} : vector<8x64xbf16>, vector<64x32xbf16>, vector<8x32xf32> -> vector<8x32xf32>
    %c0_12 = arith.constant 0 : index
    %c0_13 = arith.constant 0 : index
    %23 = vector.load %arg5[%c0_12, %c0_13] : memref<1x32xf32, #tpu.memory_space<vmem>>, vector<1x32xf32>
    %24 = vector.broadcast %23 : vector<1x32xf32> to vector<8x32xf32>
    %25 = arith.addf %22, %24 : vector<8x32xf32>
    %26 = arith.mulf %25, %25 : vector<8x32xf32>
    %27 = arith.mulf %26, %25 : vector<8x32xf32>
    %cst_14 = arith.constant 5.000000e-01 : f32
    %28 = vector.broadcast %cst_14 : f32 to vector<8x32xf32>
    %29 = arith.mulf %28, %25 : vector<8x32xf32>
    %cst_15 = arith.constant 4.471500e-02 : f32
    %30 = vector.broadcast %cst_15 : f32 to vector<8x32xf32>
    %31 = arith.mulf %30, %27 : vector<8x32xf32>
    %32 = arith.addf %25, %31 : vector<8x32xf32>
    %cst_16 = arith.constant 0.797884583 : f32
    %33 = vector.broadcast %cst_16 : f32 to vector<8x32xf32>
    %34 = arith.mulf %33, %32 : vector<8x32xf32>
    %35 = math.tanh %34 : vector<8x32xf32>
    %cst_17 = arith.constant 1.000000e+00 : f32
    %36 = vector.broadcast %cst_17 : f32 to vector<8x32xf32>
    %37 = arith.addf %36, %35 : vector<8x32xf32>
    %38 = arith.mulf %29, %37 : vector<8x32xf32>
    %39 = arith.truncf %38 : vector<8x32xf32> to vector<8x32xbf16>
    %c0_18 = arith.constant 0 : index
    %c0_19 = arith.constant 0 : index
    %40 = vector.load %arg6[%c0_18, %c0_19] : memref<32x128xbf16, #tpu.memory_space<vmem>>, vector<32x128xbf16>
    %cst_20 = arith.constant dense<0.000000e+00> : vector<8x128xf32>
    %41 = tpu.matmul %39, %40, %cst_20 {dimension_numbers = #tpu.dot_dimension_numbers<[1], [0], [0], [1], [0, 0, 1, 1], [], []>} : vector<8x32xbf16>, vector<32x128xbf16>, vector<8x128xf32> -> vector<8x128xf32>
    %c0_21 = arith.constant 0 : index
    %c0_22 = arith.constant 0 : index
    %42 = vector.load %arg7[%c0_21, %c0_22] : memref<1x128xf32, #tpu.memory_space<vmem>>, vector<1x128xf32>
    %43 = vector.broadcast %42 : vector<1x128xf32> to vector<8x128xf32>
    %44 = arith.addf %41, %43 : vector<8x128xf32>
    %45 = arith.truncf %44 : vector<8x128xf32> to vector<8x128xbf16>
    %c0_23 = arith.constant 0 : index
    %c0_24 = arith.constant 0 : index
    %46 = vector.load %arg8[%c0_23, %c0_24] : memref<8x128xbf16, #tpu.memory_space<vmem>>, vector<8x128xbf16>
    tpu.vector_store %arg8[%c0_23, %c0_24], %45 {strides = array<i32>} : memref<8x128xbf16, #tpu.memory_space<vmem>>, vector<8x128xbf16>,
    return
  }
  func.func @transform_0(%arg0: i32) -> (i32, i32) {
    %c0_i32 = arith.constant 0 : i32
    %c0_i32_0 = arith.constant 0 : i32
    return %arg0, %c0_i32 : i32, i32
  }
  func.func @transform_1(%arg0: i32) -> (i32, i32) {
    %c0_i32 = arith.constant 0 : i32
    %c0_i32_0 = arith.constant 0 : i32
    %c0_i32_1 = arith.constant 0 : i32
    return %c0_i32, %c0_i32_0 : i32, i32
  }
  func.func @transform_2(%arg0: i32) -> (i32, i32) {
    %c0_i32 = arith.constant 0 : i32
    %c0_i32_0 = arith.constant 0 : i32
    %c0_i32_1 = arith.constant 0 : i32
    return %c0_i32, %c0_i32_0 : i32, i32
  }
  func.func @transform_3(%arg0: i32) -> (i32, i32) {
    %c0_i32 = arith.constant 0 : i32
    %c0_i32_0 = arith.constant 0 : i32
    %c0_i32_1 = arith.constant 0 : i32
    return %c0_i32, %c0_i32_0 : i32, i32
  }
  func.func @transform_4(%arg0: i32) -> (i32, i32) {
    %c0_i32 = arith.constant 0 : i32
    %c0_i32_0 = arith.constant 0 : i32
    %c0_i32_1 = arith.constant 0 : i32
    return %c0_i32, %c0_i32_0 : i32, i32
  }
  func.func @transform_5(%arg0: i32) -> (i32, i32) {
    %c0_i32 = arith.constant 0 : i32
    %c0_i32_0 = arith.constant 0 : i32
    %c0_i32_1 = arith.constant 0 : i32
    return %c0_i32, %c0_i32_0 : i32, i32
  }
  func.func @transform_6(%arg0: i32) -> (i32, i32) {
    %c0_i32 = arith.constant 0 : i32
    %c0_i32_0 = arith.constant 0 : i32
    %c0_i32_1 = arith.constant 0 : i32
    return %c0_i32, %c0_i32_0 : i32, i32
  }
  func.func @transform_7(%arg0: i32) -> (i32, i32) {
    %c0_i32 = arith.constant 0 : i32
    %c0_i32_0 = arith.constant 0 : i32
    return %arg0, %c0_i32 : i32, i32
  }
}

module attributes {stable_mosaic.version = 11 : i64} {
  func.func @kernel(%arg0: i32, %arg1: memref<8x96xf32, #tpu.memory_space<vmem>>, %arg2: memref<96x64xbf16, #tpu.memory_space<vmem>>, %arg3: memref<1x64xf32, #tpu.memory_space<vmem>>, %arg4: memref<64x32xbf16, #tpu.memory_space<vmem>>, %arg5: memref<1x32xf32, #tpu.memory_space<vmem>>, %arg6: memref<32x128xbf16, #tpu.memory_space<vmem>>, %arg7: memref<1x128xf32, #tpu.memory_space<vmem>>, %arg8: memref<8x128xbf16, #tpu.memory_space<vmem>>) attributes {dimension_semantics = [#tpu.dimension_semantics<parallel>], iteration_bounds = array<i64: 1>, scalar_prefetch = 0 : i64, scratch_operands = 0 : i64, tpu.core_type = #tpu.core_type<tc>, window_params = [{transform_indices = @transform_0, window_bounds = array<i64: 8, 96>}, {pipeline_mode = #tpu.pipeline_mode<synchronous>, transform_indices = @transform_1, window_bounds = array<i64: 96, 64>}, {pipeline_mode = #tpu.pipeline_mode<synchronous>, transform_indices = @transform_2, window_bounds = array<i64: 1, 64>}, {pipeline_mode = #tpu.pipeline_mode<synchronous>, transform_indices = @transform_3, window_bounds = array<i64: 64, 32>}, {pipeline_mode = #tpu.pipeline_mode<synchronous>, transform_indices = @transform_4, window_bounds = array<i64: 1, 32>}, {pipeline_mode = #tpu.pipeline_mode<synchronous>, transform_indices = @transform_5, window_bounds = array<i64: 32, 128>}, {pipeline_mode = #tpu.pipeline_mode<synchronous>, transform_indices = @transform_6, window_bounds = array<i64: 1, 128>}, {transform_indices = @transform_7, window_bounds = array<i64: 8, 128>}]} {
    %c0 = arith.constant 0 : index
    %c0_0 = arith.constant 0 : index
    %0 = vector.load %arg1[%c0, %c0_0] : memref<8x96xf32, #tpu.memory_space<vmem>>, vector<8x96xf32>
    %1 = arith.truncf %0 : vector<8x96xf32> to vector<8x96xbf16>
    %c0_1 = arith.constant 0 : index
    %c0_2 = arith.constant 0 : index
    %2 = vector.load %arg2[%c0_1, %c0_2] : memref<96x64xbf16, #tpu.memory_space<vmem>>, vector<96x64xbf16>
    %cst = arith.constant dense<0.000000e+00> : vector<8x64xf32>
    %3 = tpu.matmul %1, %2, %cst {dimension_numbers = #tpu.dot_dimension_numbers<[1], [0], [0], [1], [0, 0, 1, 1], [], []>} : vector<8x96xbf16>, vector<96x64xbf16>, vector<8x64xf32> -> vector<8x64xf32>
    %c0_3 = arith.constant 0 : index
    %c0_4 = arith.constant 0 : index
    %4 = vector.load %arg3[%c0_3, %c0_4] : memref<1x64xf32, #tpu.memory_space<vmem>>, vector<1x64xf32>
    %5 = vector.broadcast %4 : vector<1x64xf32> to vector<8x64xf32>
    %6 = arith.addf %3, %5 : vector<8x64xf32>
    %7 = arith.mulf %6, %6 : vector<8x64xf32>
    %8 = arith.mulf %7, %6 : vector<8x64xf32>
    %cst_5 = arith.constant 5.000000e-01 : f32
    %9 = vector.broadcast %cst_5 : f32 to vector<8x64xf32>
    %10 = arith.mulf %9, %6 : vector<8x64xf32>
    %cst_6 = arith.constant 4.471500e-02 : f32
    %11 = vector.broadcast %cst_6 : f32 to vector<8x64xf32>
    %12 = arith.mulf %11, %8 : vector<8x64xf32>
    %13 = arith.addf %6, %12 : vector<8x64xf32>
    %cst_7 = arith.constant 0.797884583 : f32
    %14 = vector.broadcast %cst_7 : f32 to vector<8x64xf32>
    %15 = arith.mulf %14, %13 : vector<8x64xf32>
    %16 = math.tanh %15 : vector<8x64xf32>
    %cst_8 = arith.constant 1.000000e+00 : f32
    %17 = vector.broadcast %cst_8 : f32 to vector<8x64xf32>
    %18 = arith.addf %17, %16 : vector<8x64xf32>
    %19 = arith.mulf %10, %18 : vector<8x64xf32>
    %20 = arith.truncf %19 : vector<8x64xf32> to vector<8x64xbf16>
    %c0_9 = arith.constant 0 : index
    %c0_10 = arith.constant 0 : index
    %21 = vector.load %arg4[%c0_9, %c0_10] : memref<64x32xbf16, #tpu.memory_space<vmem>>, vector<64x32xbf16>
    %cst_11 = arith.constant dense<0.000000e+00> : vector<8x32xf32>
    %22 = tpu.matmul %20, %21, %cst_11 {dimension_numbers = #tpu.dot_dimension_numbers<[1], [0], [0], [1], [0, 0, 1, 1], [], []>} : vector<8x64xbf16>, vector<64x32xbf16>, vector<8x32xf32> -> vector<8x32xf32>
    %c0_12 = arith.constant 0 : index
    %c0_13 = arith.constant 0 : index
    %23 = vector.load %arg5[%c0_12, %c0_13] : memref<1x32xf32, #tpu.memory_space<vmem>>, vector<1x32xf32>
    %24 = vector.broadcast %23 : vector<1x32xf32> to vector<8x32xf32>
    %25 = arith.addf %22, %24 : vector<8x32xf32>
    %26 = arith.mulf %25, %25 : vector<8x32xf32>
    %27 = arith.mulf %26, %25 : vector<8x32xf32>
    %cst_14 = arith.constant 5.000000e-01 : f32
    %28 = vector.broadcast %cst_14 : f32 to vector<8x32xf32>
    %29 = arith.mulf %28, %25 : vector<8x32xf32>
    %cst_15 = arith.constant 4.471500e-02 : f32
    %30 = vector.broadcast %cst_15 : f32 to vector<8x32xf32>
    %31 = arith.mulf %30, %27 : vector<8x32xf32>
    %32 = arith.addf %25, %31 : vector<8x32xf32>
    %cst_16 = arith.constant 0.797884583 : f32
    %33 = vector.broadcast %cst_16 : f32 to vector<8x32xf32>
    %34 = arith.mulf %33, %32 : vector<8x32xf32>
    %35 = math.tanh %34 : vector<8x32xf32>
    %cst_17 = arith.constant 1.000000e+00 : f32
    %36 = vector.broadcast %cst_17 : f32 to vector<8x32xf32>
    %37 = arith.addf %36, %35 : vector<8x32xf32>
    %38 = arith.mulf %29, %37 : vector<8x32xf32>
    %39 = arith.truncf %38 : vector<8x32xf32> to vector<8x32xbf16>
    %c0_18 = arith.constant 0 : index
    %c0_19 = arith.constant 0 : index
    %40 = vector.load %arg6[%c0_18, %c0_19] : memref<32x128xbf16, #tpu.memory_space<vmem>>, vector<32x128xbf16>
    %cst_20 = arith.constant dense<0.000000e+00> : vector<8x128xf32>
    %41 = tpu.matmul %39, %40, %cst_20 {dimension_numbers = #tpu.dot_dimension_numbers<[1], [0], [0], [1], [0, 0, 1, 1], [], []>} : vector<8x32xbf16>, vector<32x128xbf16>, vector<8x128xf32> -> vector<8x128xf32>
    %c0_21 = arith.constant 0 : index
    %c0_22 = arith.constant 0 : index
    %42 = vector.load %arg7[%c0_21, %c0_22] : memref<1x128xf32, #tpu.memory_space<vmem>>, vector<1x128xf32>
    %43 = vector.broadcast %42 : vector<1x128xf32> to vector<8x128xf32>
    %44 = arith.addf %41, %43 : vector<8x128xf32>
    %45 = arith.truncf %44 : vector<8x128xf32> to vector<8x128xbf16>
    %c0_23 = arith.constant 0 : index
    %c0_24 = arith.constant 0 : index
    %46 = vector.load %arg8[%c0_23, %c0_24] : memref<8x128xbf16, #tpu.memory_space<vmem>>, vector<8x128xbf16>
    tpu.vector_store %arg8[%c0_23, %c0_24], %45 {strides = array<i32>} : memref<8x128xbf16, #tpu.memory_space<vmem>>, vector<8x128xbf16>,
    return
  }
  func.func @transform_0(%arg0: i32) -> (i32, i32) {
    %c0_i32 = arith.constant 0 : i32
    %c0_i32_0 = arith.constant 0 : i32
    return %arg0, %c0_i32 : i32, i32
  }
  func.func @transform_1(%arg0: i32) -> (i32, i32) {
    %c0_i32 = arith.constant 0 : i32
    %c0_i32_0 = arith.constant 0 : i32
    %c0_i32_1 = arith.constant 0 : i32
    return %c0_i32, %c0_i32_0 : i32, i32
  }
  func.func @transform_2(%arg0: i32) -> (i32, i32) {
    %c0_i32 = arith.constant 0 : i32
    %c0_i32_0 = arith.constant 0 : i32
    %c0_i32_1 = arith.constant 0 : i32
    return %c0_i32, %c0_i32_0 : i32, i32
  }
  func.func @transform_3(%arg0: i32) -> (i32, i32) {
    %c0_i32 = arith.constant 0 : i32
    %c0_i32_0 = arith.constant 0 : i32
    %c0_i32_1 = arith.constant 0 : i32
    return %c0_i32, %c0_i32_0 : i32, i32
  }
  func.func @transform_4(%arg0: i32) -> (i32, i32) {
    %c0_i32 = arith.constant 0 : i32
    %c0_i32_0 = arith.constant 0 : i32
    %c0_i32_1 = arith.constant 0 : i32
    return %c0_i32, %c0_i32_0 : i32, i32
  }
  func.func @transform_5(%arg0: i32) -> (i32, i32) {
    %c0_i32 = arith.constant 0 : i32
    %c0_i32_0 = arith.constant 0 : i32
    %c0_i32_1 = arith.constant 0 : i32
    return %c0_i32, %c0_i32_0 : i32, i32
  }
  func.func @transform_6(%arg0: i32) -> (i32, i32) {
    %c0_i32 = arith.constant 0 : i32
    %c0_i32_0 = arith.constant 0 : i32
    %c0_i32_1 = arith.constant 0 : i32
    return %c0_i32, %c0_i32_0 : i32, i32
  }
  func.func @transform_7(%arg0: i32) -> (i32, i32) {
    %c0_i32 = arith.constant 0 : i32
    %c0_i32_0 = arith.constant 0 : i32
    return %arg0, %c0_i32 : i32, i32
  }
}

</mosaic_0001>

<llo_original>
// kernel: tpu_custom_call.1
$region0: #{tpu_custom_call.1}
  #allocation0 [shape = 'u32[]', space=smem, size = 0x4, offset = 0x4, fixed_abs, tag = 'smem constant byte address 0x4 - core index']
  #allocation1 [shape = 'u32[144,128]{1,0:T(1,128)}', space=vmem, size = 0x12000, scoped, tag = 'internal scratch']
  %s0 = inlined_call_operand.vmem [shape: f32[8,96], index: 0, kind: input, shape index: {}]
  %s1 = inlined_call_operand.vmem [shape: bf16[96,64], index: 1, kind: input, shape index: {}]
  %s2 = inlined_call_operand.vmem [shape: f32[1,64], index: 2, kind: input, shape index: {}]
  %s3 = inlined_call_operand.vmem [shape: bf16[64,32], index: 3, kind: input, shape index: {}]
  %s4 = inlined_call_operand.vmem [shape: f32[1,32], index: 4, kind: input, shape index: {}]
  %s5 = inlined_call_operand.vmem [shape: bf16[32,128], index: 5, kind: input, shape index: {}]
  %s6 = inlined_call_operand.vmem [shape: f32[1,128], index: 6, kind: input, shape index: {}]
  %s7 = inlined_call_operand.hbm [shape: bf16[8,128], index: 7, kind: output, shape index: {}]
  %s8 = sld [smem:[#allocation0]]
  $region38: #{tpu_custom_call.1} parent=0
    _
  %s10 = ssub.s32 1, %s8
  %s11 = scalar_select 0, %s10, %s8
  $region1: #{tpu_custom_call.1} parent=0
    #allocation2 [shape = 'u8[2048]{0}', space=vmem, size = 0x800, scoped, tag = 'output window, operand 0, single buffered']
    #allocation3 [shape = 's32[1]{0}', space=sflag, size = 0x4, scoped, tag = 'scoped memory for tpu_custom_call.1']
    %12 = vsyncpa [#allocation3], 0
    // Predicated region
    $region2: #{tpu_custom_call.1} parent=1 // pred_check
      _
    $region3: #{tpu_custom_call.1} parent=1 // pred_check_branch
      %14 = sbr.rel (0) target = $region5
    $region4: #{tpu_custom_call.1} parent=1 // pred_region
      _
    $region5: #{tpu_custom_call.1} parent=1 // pred_fallthru
      _
    // Predicated region
    $region6: #{tpu_custom_call.1} parent=1 // pred_check
      _
    $region7: #{tpu_custom_call.1} parent=1 // pred_check_branch
      %16 = sbr.rel (0) target = $region9
    $region8: #{tpu_custom_call.1} parent=1 // pred_region
      _
    $region9: #{tpu_custom_call.1} parent=1 // pred_fallthru
      _
    // Predicated region
    $region10: #{tpu_custom_call.1} parent=1 // pred_check
      _
    $region11: #{tpu_custom_call.1} parent=1 // pred_check_branch
      %18 = sbr.rel (0) target = $region13
    $region12: #{tpu_custom_call.1} parent=1 // pred_region
      _
    $region13: #{tpu_custom_call.1} parent=1 // pred_fallthru
      _
    // Predicated region
    $region14: #{tpu_custom_call.1} parent=1 // pred_check
      _
    $region15: #{tpu_custom_call.1} parent=1 // pred_check_branch
      %20 = sbr.rel (0) target = $region17
    $region16: #{tpu_custom_call.1} parent=1 // pred_region
      _
    $region17: #{tpu_custom_call.1} parent=1 // pred_fallthru
      _
    // Predicated region
    $region18: #{tpu_custom_call.1} parent=1 // pred_check
      _
    $region19: #{tpu_custom_call.1} parent=1 // pred_check_branch
      %22 = sbr.rel (0) target = $region21
    $region20: #{tpu_custom_call.1} parent=1 // pred_region
      _
    $region21: #{tpu_custom_call.1} parent=1 // pred_fallthru
      _
    // Predicated region
    $region22: #{tpu_custom_call.1} parent=1 // pred_check
      _
    $region23: #{tpu_custom_call.1} parent=1 // pred_check_branch
      %24 = sbr.rel (0) target = $region25
    $region24: #{tpu_custom_call.1} parent=1 // pred_region
      _
    $region25: #{tpu_custom_call.1} parent=1 // pred_fallthru
      _
    // Predicated region
    $region26: #{tpu_custom_call.1} parent=1 // pred_check
      _
    $region27: #{tpu_custom_call.1} parent=1 // pred_check_branch
      %26 = sbr.rel (0) target = $region29
    $region28: #{tpu_custom_call.1} parent=1 // pred_region
      _
    $region29: #{tpu_custom_call.1} parent=1 // pred_fallthru
      _
    %v28 = vld [vmem:[%s0] sm:$0xff]
    %v29 = vpack.c.bf16 %v28, %v28
    %v30 = vld [vmem:[%s1] sm:$0xf]
    %v31 = vld [vmem:[%s1 + $0x4] sm:$0xf]
    %v32 = vld [vmem:[%s1 + $0x8] sm:$0xf]
    %v33 = vld [vmem:[%s1 + $0xc] sm:$0xf]
    %v34 = vld [vmem:[%s1 + $0x10] sm:$0xf]
    %v35 = vld [vmem:[%s1 + $0x14] sm:$0xf]
    %v36 = vld [vmem:[%s1 + $0x18] sm:$0xf]
    %v37 = vld [vmem:[%s1 + $0x1c] sm:$0xf]
    %v38 = vld [vmem:[%s1 + $0x20] sm:$0xf]
    %v39 = vld [vmem:[%s1 + $0x24] sm:$0xf]
    %v40 = vld [vmem:[%s1 + $0x28] sm:$0xf]
    %v41 = vld [vmem:[%s1 + $0x2c] sm:$0xf]
    %v42 = vld [vmem:[%s2] sm:$0x1]
    %v44 = vlaneseq
    %v45 = vshrl.u32 %v44, 7
    %v46 = vsub.s32 0, %v45
    %v47 = vrot.slane %v42, %v46
    %v61 = vunpack.c.l.b16 %v30
    %v62 = vunpack.c.l.b16 %v31
    %v63 = vunpack.c.l.b16 %v32
    %v64 = vunpack.c.l.b16 %v33
    %v65 = vunpack.c.l.b16 %v34
    %v66 = vunpack.c.l.b16 %v35
    %v67 = vunpack.c.l.b16 %v36
    %v68 = vunpack.c.l.b16 %v37
    %v69 = vunpack.c.l.b16 %v38
    %v70 = vunpack.c.l.b16 %v39
    %v71 = vunpack.c.l.b16 %v40
    %v72 = vunpack.c.l.b16 %v41
    %v73 = vpack.c.b16 %v62, %v61
    %v74 = vpack.c.b16 %v64, %v63
    %v75 = vpack.c.b16 %v66, %v65
    %v76 = vpack.c.b16 %v68, %v67
    %v77 = vpack.c.b16 %v70, %v69
    %v78 = vpack.c.b16 %v72, %v71
    %vm85 = vcmask 785408
    %v87 = vsel %vm85, %v29, 0
    %89 = vmatprep.subr.bf16.mxu0 0
    %90 = vmatpush1.bf16.msra.mxu0 0
    %91 = vmatprep.subr.bf16.mxu0 0
    %92 = vmatpush1.bf16.msra.mxu0 0
    %93 = vmatprep.subr.bf16.mxu0 0
    %94 = vmatpush1.bf16.msra.mxu0 %v78
    %95 = vmatprep.subr.bf16.mxu0 0
    %96 = vmatpush1.bf16.msra.mxu0 %v77
    %97 = vmatprep.subr.bf16.mxu0 0
    %98 = vmatpush1.bf16.msra.mxu0 %v76
    %99 = vmatprep.subr.bf16.mxu0 0
    %100 = vmatpush1.bf16.msra.mxu0 %v75
    %101 = vmatprep.subr.bf16.mxu0 0
    %102 = vmatpush1.bf16.msra.mxu0 %v74
    %103 = vmatprep.subr.bf16.mxu0 0
    %104 = vmatpush1.bf16.msra.mxu0 %v73
    %105 = vmatprep.subr.bf16.mxu0 0
    %106 = vmatpush2.bf16.msra.mxu0 0
    %107 = vmatprep.subr.bf16.mxu0 0
    %108 = vmatpush2.bf16.msra.mxu0 0
    %109 = vmatprep.subr.bf16.mxu0 0
    %110 = vmatpush2.bf16.msra.mxu0 0
    %111 = vmatprep.subr.bf16.mxu0 0
    %112 = vmatpush2.bf16.msra.mxu0 0
    %113 = vmatprep.subr.bf16.mxu0 0
    %114 = vmatpush2.bf16.msra.mxu0 0
    %115 = vmatprep.subr.bf16.mxu0 0
    %116 = vmatpush2.bf16.msra.mxu0 0
    %117 = vmatprep.subr.bf16.mxu0 0
    %118 = vmatpush2.bf16.msra.mxu0 0
    %119 = vmatprep.subr.bf16.mxu0 0
    %120 = vmatpush2.bf16.msra.mxu0 0
    %121 = vmatprep.mubr.bf16.mxu0 0
    %122 = vmatmul.mubr.bf16.gmra.mxu0 %v87
    %v123 = vpop.f32.mrf.mxu0
    %v124 = vadd.f32 %v47, %v123
    %v125 = vpop.f32.mrf.mxu0
    %v126 = vpop.f32.mrf.mxu0
    %v127 = vpop.f32.mrf.mxu0
    %128 = vdwg.mxu0
    %v129 = vmul.f32 %v124, %v124
    %v130 = vmul.f32 %v129, %v124
    %v131 = vmul.f32 %v124, 0.5
    %v132 = vmul.f32 %v130, 0.044715
    %v133 = vadd.f32 %v124, %v132
    %v134 = vmul.f32 %v133, 0.7978846
    %v135 = vtanh.pop %v134
    %v136 = vadd.f32 %v135, 1.0
    %v137 = vmul.f32 %v131, %v136
    %v138 = vpack.c.bf16 %v137, %v137
    %v139 = vld [vmem:[%s3] sm:$0xf]
    %v140 = vld [vmem:[%s3 + $0x4] sm:$0xf]
    %v141 = vld [vmem:[%s3 + $0x8] sm:$0xf]
    %v142 = vld [vmem:[%s3 + $0xc] sm:$0xf]
    %v143 = vld [vmem:[%s3 + $0x10] sm:$0xf]
    %v144 = vld [vmem:[%s3 + $0x14] sm:$0xf]
    %v145 = vld [vmem:[%s3 + $0x18] sm:$0xf]
    %v146 = vld [vmem:[%s3 + $0x1c] sm:$0xf]
    %v147 = vld [vmem:[%s4] sm:$0x1]
    %v149 = vlaneseq
    %v150 = vshrl.u32 %v149, 7
    %v151 = vsub.s32 0, %v150
    %v152 = vrot.slane %v147, %v151
    %v162 = vunpack.c.l.b16 %v139
    %v163 = vunpack.c.l.b16 %v140
    %v164 = vunpack.c.l.b16 %v141
    %v165 = vunpack.c.l.b16 %v142
    %v166 = vunpack.c.l.b16 %v143
    %v167 = vunpack.c.l.b16 %v144
    %v168 = vunpack.c.l.b16 %v145
    %v169 = vunpack.c.l.b16 %v146
    %v170 = vpack.c.b16 %v163, %v162
    %v171 = vpack.c.b16 %v165, %v164
    %v172 = vpack.c.b16 %v167, %v166
    %v173 = vpack.c.b16 %v169, %v168
    %vm178 = vcmask 523264
    %v180 = vsel %vm178, %v138, 0
    %182 = vmatprep.subr.bf16.mxu0 0
    %183 = vmatpush1.bf16.msra.mxu0 0
    %184 = vmatprep.subr.bf16.mxu0 0
    %185 = vmatpush1.bf16.msra.mxu0 0
    %186 = vmatprep.subr.bf16.mxu0 0
    %187 = vmatpush1.bf16.msra.mxu0 0
    %188 = vmatprep.subr.bf16.mxu0 0
    %189 = vmatpush1.bf16.msra.mxu0 0
    %190 = vmatprep.subr.bf16.mxu0 0
    %191 = vmatpush1.bf16.msra.mxu0 %v173
    %192 = vmatprep.subr.bf16.mxu0 0
    %193 = vmatpush1.bf16.msra.mxu0 %v172
    %194 = vmatprep.subr.bf16.mxu0 0
    %195 = vmatpush1.bf16.msra.mxu0 %v171
    %196 = vmatprep.subr.bf16.mxu0 0
    %197 = vmatpush1.bf16.msra.mxu0 %v170
    %198 = vmatprep.subr.bf16.mxu0 0
    %199 = vmatpush2.bf16.msra.mxu0 0
    %200 = vmatprep.subr.bf16.mxu0 0
    %201 = vmatpush2.bf16.msra.mxu0 0
    %202 = vmatprep.subr.bf16.mxu0 0
    %203 = vmatpush2.bf16.msra.mxu0 0
    %204 = vmatprep.subr.bf16.mxu0 0
    %205 = vmatpush2.bf16.msra.mxu0 0
    %206 = vmatprep.subr.bf16.mxu0 0
    %207 = vmatpush2.bf16.msra.mxu0 0
    %208 = vmatprep.subr.bf16.mxu0 0
    %209 = vmatpush2.bf16.msra.mxu0 0
    %210 = vmatprep.subr.bf16.mxu0 0
    %211 = vmatpush2.bf16.msra.mxu0 0
    %212 = vmatprep.subr.bf16.mxu0 0
    %213 = vmatpush2.bf16.msra.mxu0 0
    %214 = vmatprep.mubr.bf16.mxu0 0
    %215 = vmatmul.mubr.bf16.gmra.mxu0 %v180
    %v216 = vpop.f32.mrf.mxu0
    %v217 = vadd.f32 %v152, %v216
    %v218 = vpop.f32.mrf.mxu0
    %v219 = vpop.f32.mrf.mxu0
    %v220 = vpop.f32.mrf.mxu0
    %221 = vdwg.mxu0
    %v222 = vmul.f32 %v217, %v217
    %v223 = vmul.f32 %v222, %v217
    %v224 = vmul.f32 %v217, 0.5
    %v225 = vmul.f32 %v223, 0.044715
    %v226 = vadd.f32 %v217, %v225
    %v227 = vmul.f32 %v226, 0.7978846
    %v228 = vtanh.pop %v227
    %v229 = vadd.f32 %v228, 1.0
    %v230 = vmul.f32 %v224, %v229
    %v231 = vpack.c.bf16 %v230, %v230
    %v232 = vld [vmem:[%s5] sm:$0xf]
    %v233 = vld [vmem:[%s5 + $0x4] sm:$0xf]
    %v234 = vld [vmem:[%s5 + $0x8] sm:$0xf]
    %v235 = vld [vmem:[%s5 + $0xc] sm:$0xf]
    %v236 = vld [vmem:[%s6] sm:$0x1]
    %v238 = vlaneseq
    %v239 = vshrl.u32 %v238, 7
    %v240 = vsub.s32 0, %v239
    %v241 = vrot.slane %v236, %v240
    %v247 = vunpack.c.l.b16 %v232
    %v248 = vunpack.c.l.b16 %v233
    %v249 = vunpack.c.l.b16 %v234
    %v250 = vunpack.c.l.b16 %v235
    %v251 = vpack.c.b16 %v248, %v247
    %v252 = vpack.c.b16 %v250, %v249
    %vm255 = vcmask 261120
    %v257 = vsel %vm255, %v231, 0
    %259 = vmatprep.subr.bf16.mxu0 0
    %260 = vmatpush1.bf16.msra.mxu0 0
    %261 = vmatprep.subr.bf16.mxu0 0
    %262 = vmatpush1.bf16.msra.mxu0 0
    %263 = vmatprep.subr.bf16.mxu0 0
    %264 = vmatpush1.bf16.msra.mxu0 0
    %265 = vmatprep.subr.bf16.mxu0 0
    %266 = vmatpush1.bf16.msra.mxu0 0
    %267 = vmatprep.subr.bf16.mxu0 0
    %268 = vmatpush1.bf16.msra.mxu0 0
    %269 = vmatprep.subr.bf16.mxu0 0
    %270 = vmatpush1.bf16.msra.mxu0 0
    %271 = vmatprep.subr.bf16.mxu0 0
    %272 = vmatpush1.bf16.msra.mxu0 %v252
    %273 = vmatprep.subr.bf16.mxu0 0
    %274 = vmatpush1.bf16.msra.mxu0 %v251
    %275 = vmatprep.subr.bf16.mxu0 0
    %276 = vmatpush2.bf16.msra.mxu0 0
    %277 = vmatprep.subr.bf16.mxu0 0
    %278 = vmatpush2.bf16.msra.mxu0 0
    %279 = vmatprep.subr.bf16.mxu0 0
    %280 = vmatpush2.bf16.msra.mxu0 0
    %281 = vmatprep.subr.bf16.mxu0 0
    %282 = vmatpush2.bf16.msra.mxu0 0
    %283 = vmatprep.subr.bf16.mxu0 0
    %284 = vmatpush2.bf16.msra.mxu0 0
    %285 = vmatprep.subr.bf16.mxu0 0
    %286 = vmatpush2.bf16.msra.mxu0 0
    %287 = vmatprep.subr.bf16.mxu0 0
    %288 = vmatpush2.bf16.msra.mxu0 0
    %289 = vmatprep.subr.bf16.mxu0 0
    %290 = vmatpush2.bf16.msra.mxu0 0
    %291 = vmatprep.mubr.bf16.mxu0 0
    %292 = vmatmul.mubr.bf16.gmra.mxu0 %v257
    %v293 = vpop.f32.mrf.mxu0
    %v294 = vadd.f32 %v241, %v293
    %v295 = vpop.f32.mrf.mxu0
    %v296 = vpop.f32.mrf.mxu0
    %v297 = vpop.f32.mrf.mxu0
    %298 = vdwg.mxu0
    %v299 = vpack.c.bf16 %v294, %v294
    %300 = vst [vmem:[#allocation2] sm:$0xf] %v299
    // Predicated region
    $region30: #{tpu_custom_call.1} parent=1 // pred_check
      _
    $region31: #{tpu_custom_call.1} parent=1 // pred_check_branch
      %302 = sbr.rel (0) target = $region33
    $region32: #{tpu_custom_call.1} parent=1 // pred_region
      %s304 = ssub.s32 64, 64
      %305 = vsyncadd [#allocation3], %s304
      %s307 = sshll.u32 [#allocation2], 4
      %s308 = int_to_ptr.vmem [resolvable:$true] %s307
      %310 = dma.vmem_to_hbm [thread:$0]  %s308, 64, %s7, [#allocation3]
    $region33: #{tpu_custom_call.1} parent=1 // pred_fallthru
      _
    // Predicated region
    $region34: #{tpu_custom_call.1} parent=1 // pred_check
      _
    $region35: #{tpu_custom_call.1} parent=1 // pred_check_branch
      %312 = sbr.rel (0) target = $region37
    $region36: #{tpu_custom_call.1} parent=1 // pred_region
      %313 = dma.done [#allocation3], 64
    $region37: #{tpu_custom_call.1} parent=1 // pred_fallthru
      _
    %314 = vsyncpa [#allocation3], 1

// kernel: tpu_custom_call.1
$region0: #{tpu_custom_call.1}
  #allocation0 [shape = 'u32[]', space=smem, size = 0x4, offset = 0x4, fixed_abs, tag = 'smem constant byte address 0x4 - core index']
  #allocation1 [shape = 'u32[144,128]{1,0:T(1,128)}', space=vmem, size = 0x12000, scoped, tag = 'internal scratch']
  %s0 = inlined_call_operand.vmem [shape: f32[8,96], index: 0, kind: input, shape index: {}]
  %s1 = inlined_call_operand.vmem [shape: bf16[96,64], index: 1, kind: input, shape index: {}]
  %s2 = inlined_call_operand.vmem [shape: f32[1,64], index: 2, kind: input, shape index: {}]
  %s3 = inlined_call_operand.vmem [shape: bf16[64,32], index: 3, kind: input, shape index: {}]
  %s4 = inlined_call_operand.vmem [shape: f32[1,32], index: 4, kind: input, shape index: {}]
  %s5 = inlined_call_operand.vmem [shape: bf16[32,128], index: 5, kind: input, shape index: {}]
  %s6 = inlined_call_operand.vmem [shape: f32[1,128], index: 6, kind: input, shape index: {}]
  %s7 = inlined_call_operand.hbm [shape: bf16[8,128], index: 7, kind: output, shape index: {}]
  %s8 = sld [smem:[#allocation0]]
  $region38: #{tpu_custom_call.1} parent=0
    _
  %s10 = ssub.s32 1, %s8
  %s11 = scalar_select 0, %s10, %s8
  $region1: #{tpu_custom_call.1} parent=0
    #allocation2 [shape = 'u8[2048]{0}', space=vmem, size = 0x800, scoped, tag = 'output window, operand 0, single buffered']
    #allocation3 [shape = 's32[1]{0}', space=sflag, size = 0x4, scoped, tag = 'scoped memory for tpu_custom_call.1']
    %12 = vsyncpa [#allocation3], 0
    // Predicated region
    $region2: #{tpu_custom_call.1} parent=1 // pred_check
      _
    $region3: #{tpu_custom_call.1} parent=1 // pred_check_branch
      %14 = sbr.rel (0) target = $region5
    $region4: #{tpu_custom_call.1} parent=1 // pred_region
      _
    $region5: #{tpu_custom_call.1} parent=1 // pred_fallthru
      _
    // Predicated region
    $region6: #{tpu_custom_call.1} parent=1 // pred_check
      _
    $region7: #{tpu_custom_call.1} parent=1 // pred_check_branch
      %16 = sbr.rel (0) target = $region9
    $region8: #{tpu_custom_call.1} parent=1 // pred_region
      _
    $region9: #{tpu_custom_call.1} parent=1 // pred_fallthru
      _
    // Predicated region
    $region10: #{tpu_custom_call.1} parent=1 // pred_check
      _
    $region11: #{tpu_custom_call.1} parent=1 // pred_check_branch
      %18 = sbr.rel (0) target = $region13
    $region12: #{tpu_custom_call.1} parent=1 // pred_region
      _
    $region13: #{tpu_custom_call.1} parent=1 // pred_fallthru
      _
    // Predicated region
    $region14: #{tpu_custom_call.1} parent=1 // pred_check
      _
    $region15: #{tpu_custom_call.1} parent=1 // pred_check_branch
      %20 = sbr.rel (0) target = $region17
    $region16: #{tpu_custom_call.1} parent=1 // pred_region
      _
    $region17: #{tpu_custom_call.1} parent=1 // pred_fallthru
      _
    // Predicated region
    $region18: #{tpu_custom_call.1} parent=1 // pred_check
      _
    $region19: #{tpu_custom_call.1} parent=1 // pred_check_branch
      %22 = sbr.rel (0) target = $region21
    $region20: #{tpu_custom_call.1} parent=1 // pred_region
      _
    $region21: #{tpu_custom_call.1} parent=1 // pred_fallthru
      _
    // Predicated region
    $region22: #{tpu_custom_call.1} parent=1 // pred_check
      _
    $region23: #{tpu_custom_call.1} parent=1 // pred_check_branch
      %24 = sbr.rel (0) target = $region25
    $region24: #{tpu_custom_call.1} parent=1 // pred_region
      _
    $region25: #{tpu_custom_call.1} parent=1 // pred_fallthru
      _
    // Predicated region
    $region26: #{tpu_custom_call.1} parent=1 // pred_check
      _
    $region27: #{tpu_custom_call.1} parent=1 // pred_check_branch
      %26 = sbr.rel (0) target = $region29
    $region28: #{tpu_custom_call.1} parent=1 // pred_region
      _
    $region29: #{tpu_custom_call.1} parent=1 // pred_fallthru
      _
    %v28 = vld [vmem:[%s0] sm:$0xff]
    %v29 = vpack.c.bf16 %v28, %v28
    %v30 = vld [vmem:[%s1] sm:$0xf]
    %v31 = vld [vmem:[%s1 + $0x4] sm:$0xf]
    %v32 = vld [vmem:[%s1 + $0x8] sm:$0xf]
    %v33 = vld [vmem:[%s1 + $0xc] sm:$0xf]
    %v34 = vld [vmem:[%s1 + $0x10] sm:$0xf]
    %v35 = vld [vmem:[%s1 + $0x14] sm:$0xf]
    %v36 = vld [vmem:[%s1 + $0x18] sm:$0xf]
    %v37 = vld [vmem:[%s1 + $0x1c] sm:$0xf]
    %v38 = vld [vmem:[%s1 + $0x20] sm:$0xf]
    %v39 = vld [vmem:[%s1 + $0x24] sm:$0xf]
    %v40 = vld [vmem:[%s1 + $0x28] sm:$0xf]
    %v41 = vld [vmem:[%s1 + $0x2c] sm:$0xf]
    %v42 = vld [vmem:[%s2] sm:$0x1]
    %v44 = vlaneseq
    %v45 = vshrl.u32 %v44, 7
    %v46 = vsub.s32 0, %v45
    %v47 = vrot.slane %v42, %v46
    %v61 = vunpack.c.l.b16 %v30
    %v62 = vunpack.c.l.b16 %v31
    %v63 = vunpack.c.l.b16 %v32
    %v64 = vunpack.c.l.b16 %v33
    %v65 = vunpack.c.l.b16 %v34
    %v66 = vunpack.c.l.b16 %v35
    %v67 = vunpack.c.l.b16 %v36
    %v68 = vunpack.c.l.b16 %v37
    %v69 = vunpack.c.l.b16 %v38
    %v70 = vunpack.c.l.b16 %v39
    %v71 = vunpack.c.l.b16 %v40
    %v72 = vunpack.c.l.b16 %v41
    %v73 = vpack.c.b16 %v62, %v61
    %v74 = vpack.c.b16 %v64, %v63
    %v75 = vpack.c.b16 %v66, %v65
    %v76 = vpack.c.b16 %v68, %v67
    %v77 = vpack.c.b16 %v70, %v69
    %v78 = vpack.c.b16 %v72, %v71
    %vm85 = vcmask 785408
    %v87 = vsel %vm85, %v29, 0
    %89 = vmatprep.subr.bf16.mxu0 0
    %90 = vmatpush1.bf16.msra.mxu0 0
    %91 = vmatprep.subr.bf16.mxu0 0
    %92 = vmatpush1.bf16.msra.mxu0 0
    %93 = vmatprep.subr.bf16.mxu0 0
    %94 = vmatpush1.bf16.msra.mxu0 %v78
    %95 = vmatprep.subr.bf16.mxu0 0
    %96 = vmatpush1.bf16.msra.mxu0 %v77
    %97 = vmatprep.subr.bf16.mxu0 0
    %98 = vmatpush1.bf16.msra.mxu0 %v76
    %99 = vmatprep.subr.bf16.mxu0 0
    %100 = vmatpush1.bf16.msra.mxu0 %v75
    %101 = vmatprep.subr.bf16.mxu0 0
    %102 = vmatpush1.bf16.msra.mxu0 %v74
    %103 = vmatprep.subr.bf16.mxu0 0
    %104 = vmatpush1.bf16.msra.mxu0 %v73
    %105 = vmatprep.subr.bf16.mxu0 0
    %106 = vmatpush2.bf16.msra.mxu0 0
    %107 = vmatprep.subr.bf16.mxu0 0
    %108 = vmatpush2.bf16.msra.mxu0 0
    %109 = vmatprep.subr.bf16.mxu0 0
    %110 = vmatpush2.bf16.msra.mxu0 0
    %111 = vmatprep.subr.bf16.mxu0 0
    %112 = vmatpush2.bf16.msra.mxu0 0
    %113 = vmatprep.subr.bf16.mxu0 0
    %114 = vmatpush2.bf16.msra.mxu0 0
    %115 = vmatprep.subr.bf16.mxu0 0
    %116 = vmatpush2.bf16.msra.mxu0 0
    %117 = vmatprep.subr.bf16.mxu0 0
    %118 = vmatpush2.bf16.msra.mxu0 0
    %119 = vmatprep.subr.bf16.mxu0 0
    %120 = vmatpush2.bf16.msra.mxu0 0
    %121 = vmatprep.mubr.bf16.mxu0 0
    %122 = vmatmul.mubr.bf16.gmra.mxu0 %v87
    %v123 = vpop.f32.mrf.mxu0
    %v124 = vadd.f32 %v47, %v123
    %v125 = vpop.f32.mrf.mxu0
    %v126 = vpop.f32.mrf.mxu0
    %v127 = vpop.f32.mrf.mxu0
    %128 = vdwg.mxu0
    %v129 = vmul.f32 %v124, %v124
    %v130 = vmul.f32 %v129, %v124
    %v131 = vmul.f32 %v124, 0.5
    %v132 = vmul.f32 %v130, 0.044715
    %v133 = vadd.f32 %v124, %v132
    %v134 = vmul.f32 %v133, 0.7978846
    %v135 = vtanh.pop %v134
    %v136 = vadd.f32 %v135, 1.0
    %v137 = vmul.f32 %v131, %v136
    %v138 = vpack.c.bf16 %v137, %v137
    %v139 = vld [vmem:[%s3] sm:$0xf]
    %v140 = vld [vmem:[%s3 + $0x4] sm:$0xf]
    %v141 = vld [vmem:[%s3 + $0x8] sm:$0xf]
    %v142 = vld [vmem:[%s3 + $0xc] sm:$0xf]
    %v143 = vld [vmem:[%s3 + $0x10] sm:$0xf]
    %v144 = vld [vmem:[%s3 + $0x14] sm:$0xf]
    %v145 = vld [vmem:[%s3 + $0x18] sm:$0xf]
    %v146 = vld [vmem:[%s3 + $0x1c] sm:$0xf]
    %v147 = vld [vmem:[%s4] sm:$0x1]
    %v149 = vlaneseq
    %v150 = vshrl.u32 %v149, 7
    %v151 = vsub.s32 0, %v150
    %v152 = vrot.slane %v147, %v151
    %v162 = vunpack.c.l.b16 %v139
    %v163 = vunpack.c.l.b16 %v140
    %v164 = vunpack.c.l.b16 %v141
    %v165 = vunpack.c.l.b16 %v142
    %v166 = vunpack.c.l.b16 %v143
    %v167 = vunpack.c.l.b16 %v144
    %v168 = vunpack.c.l.b16 %v145
    %v169 = vunpack.c.l.b16 %v146
    %v170 = vpack.c.b16 %v163, %v162
    %v171 = vpack.c.b16 %v165, %v164
    %v172 = vpack.c.b16 %v167, %v166
    %v173 = vpack.c.b16 %v169, %v168
    %vm178 = vcmask 523264
    %v180 = vsel %vm178, %v138, 0
    %182 = vmatprep.subr.bf16.mxu0 0
    %183 = vmatpush1.bf16.msra.mxu0 0
    %184 = vmatprep.subr.bf16.mxu0 0
    %185 = vmatpush1.bf16.msra.mxu0 0
    %186 = vmatprep.subr.bf16.mxu0 0
    %187 = vmatpush1.bf16.msra.mxu0 0
    %188 = vmatprep.subr.bf16.mxu0 0
    %189 = vmatpush1.bf16.msra.mxu0 0
    %190 = vmatprep.subr.bf16.mxu0 0
    %191 = vmatpush1.bf16.msra.mxu0 %v173
    %192 = vmatprep.subr.bf16.mxu0 0
    %193 = vmatpush1.bf16.msra.mxu0 %v172
    %194 = vmatprep.subr.bf16.mxu0 0
    %195 = vmatpush1.bf16.msra.mxu0 %v171
    %196 = vmatprep.subr.bf16.mxu0 0
    %197 = vmatpush1.bf16.msra.mxu0 %v170
    %198 = vmatprep.subr.bf16.mxu0 0
    %199 = vmatpush2.bf16.msra.mxu0 0
    %200 = vmatprep.subr.bf16.mxu0 0
    %201 = vmatpush2.bf16.msra.mxu0 0
    %202 = vmatprep.subr.bf16.mxu0 0
    %203 = vmatpush2.bf16.msra.mxu0 0
    %204 = vmatprep.subr.bf16.mxu0 0
    %205 = vmatpush2.bf16.msra.mxu0 0
    %206 = vmatprep.subr.bf16.mxu0 0
    %207 = vmatpush2.bf16.msra.mxu0 0
    %208 = vmatprep.subr.bf16.mxu0 0
    %209 = vmatpush2.bf16.msra.mxu0 0
    %210 = vmatprep.subr.bf16.mxu0 0
    %211 = vmatpush2.bf16.msra.mxu0 0
    %212 = vmatprep.subr.bf16.mxu0 0
    %213 = vmatpush2.bf16.msra.mxu0 0
    %214 = vmatprep.mubr.bf16.mxu0 0
    %215 = vmatmul.mubr.bf16.gmra.mxu0 %v180
    %v216 = vpop.f32.mrf.mxu0
    %v217 = vadd.f32 %v152, %v216
    %v218 = vpop.f32.mrf.mxu0
    %v219 = vpop.f32.mrf.mxu0
    %v220 = vpop.f32.mrf.mxu0
    %221 = vdwg.mxu0
    %v222 = vmul.f32 %v217, %v217
    %v223 = vmul.f32 %v222, %v217
    %v224 = vmul.f32 %v217, 0.5
    %v225 = vmul.f32 %v223, 0.044715
    %v226 = vadd.f32 %v217, %v225
    %v227 = vmul.f32 %v226, 0.7978846
    %v228 = vtanh.pop %v227
    %v229 = vadd.f32 %v228, 1.0
    %v230 = vmul.f32 %v224, %v229
    %v231 = vpack.c.bf16 %v230, %v230
    %v232 = vld [vmem:[%s5] sm:$0xf]
    %v233 = vld [vmem:[%s5 + $0x4] sm:$0xf]
    %v234 = vld [vmem:[%s5 + $0x8] sm:$0xf]
    %v235 = vld [vmem:[%s5 + $0xc] sm:$0xf]
    %v236 = vld [vmem:[%s6] sm:$0x1]
    %v238 = vlaneseq
    %v239 = vshrl.u32 %v238, 7
    %v240 = vsub.s32 0, %v239
    %v241 = vrot.slane %v236, %v240
    %v247 = vunpack.c.l.b16 %v232
    %v248 = vunpack.c.l.b16 %v233
    %v249 = vunpack.c.l.b16 %v234
    %v250 = vunpack.c.l.b16 %v235
    %v251 = vpack.c.b16 %v248, %v247
    %v252 = vpack.c.b16 %v250, %v249
    %vm255 = vcmask 261120
    %v257 = vsel %vm255, %v231, 0
    %259 = vmatprep.subr.bf16.mxu0 0
    %260 = vmatpush1.bf16.msra.mxu0 0
    %261 = vmatprep.subr.bf16.mxu0 0
    %262 = vmatpush1.bf16.msra.mxu0 0
    %263 = vmatprep.subr.bf16.mxu0 0
    %264 = vmatpush1.bf16.msra.mxu0 0
    %265 = vmatprep.subr.bf16.mxu0 0
    %266 = vmatpush1.bf16.msra.mxu0 0
    %267 = vmatprep.subr.bf16.mxu0 0
    %268 = vmatpush1.bf16.msra.mxu0 0
    %269 = vmatprep.subr.bf16.mxu0 0
    %270 = vmatpush1.bf16.msra.mxu0 0
    %271 = vmatprep.subr.bf16.mxu0 0
    %272 = vmatpush1.bf16.msra.mxu0 %v252
    %273 = vmatprep.subr.bf16.mxu0 0
    %274 = vmatpush1.bf16.msra.mxu0 %v251
    %275 = vmatprep.subr.bf16.mxu0 0
    %276 = vmatpush2.bf16.msra.mxu0 0
    %277 = vmatprep.subr.bf16.mxu0 0
    %278 = vmatpush2.bf16.msra.mxu0 0
    %279 = vmatprep.subr.bf16.mxu0 0
    %280 = vmatpush2.bf16.msra.mxu0 0
    %281 = vmatprep.subr.bf16.mxu0 0
    %282 = vmatpush2.bf16.msra.mxu0 0
    %283 = vmatprep.subr.bf16.mxu0 0
    %284 = vmatpush2.bf16.msra.mxu0 0
    %285 = vmatprep.subr.bf16.mxu0 0
    %286 = vmatpush2.bf16.msra.mxu0 0
    %287 = vmatprep.subr.bf16.mxu0 0
    %288 = vmatpush2.bf16.msra.mxu0 0
    %289 = vmatprep.subr.bf16.mxu0 0
    %290 = vmatpush2.bf16.msra.mxu0 0
    %291 = vmatprep.mubr.bf16.mxu0 0
    %292 = vmatmul.mubr.bf16.gmra.mxu0 %v257
    %v293 = vpop.f32.mrf.mxu0
    %v294 = vadd.f32 %v241, %v293
    %v295 = vpop.f32.mrf.mxu0
    %v296 = vpop.f32.mrf.mxu0
    %v297 = vpop.f32.mrf.mxu0
    %298 = vdwg.mxu0
    %v299 = vpack.c.bf16 %v294, %v294
    %300 = vst [vmem:[#allocation2] sm:$0xf] %v299
    // Predicated region
    $region30: #{tpu_custom_call.1} parent=1 // pred_check
      _
    $region31: #{tpu_custom_call.1} parent=1 // pred_check_branch
      %302 = sbr.rel (0) target = $region33
    $region32: #{tpu_custom_call.1} parent=1 // pred_region
      %s304 = ssub.s32 64, 64
      %305 = vsyncadd [#allocation3], %s304
      %s307 = sshll.u32 [#allocation2], 4
      %s308 = int_to_ptr.vmem [resolvable:$true] %s307
      %310 = dma.vmem_to_hbm [thread:$0]  %s308, 64, %s7, [#allocation3]
    $region33: #{tpu_custom_call.1} parent=1 // pred_fallthru
      _
    // Predicated region
    $region34: #{tpu_custom_call.1} parent=1 // pred_check
      _
    $region35: #{tpu_custom_call.1} parent=1 // pred_check_branch
      %312 = sbr.rel (0) target = $region37
    $region36: #{tpu_custom_call.1} parent=1 // pred_region
      %313 = dma.done [#allocation3], 64
    $region37: #{tpu_custom_call.1} parent=1 // pred_fallthru
      _
    %314 = vsyncpa [#allocation3], 1

</llo_original>
